<compile_context>
chip_gen: v7x
topology: tpu7x:2x2x1
jax: 0.10.0
libtpu: 0.0.40
codegen_flags: <defaults>
</compile_context>

<pallas_src>
import functools

import jax
import jax.numpy as jnp
from jax import lax
from jax.experimental import pallas as pl
from jax.experimental.pallas import tpu as pltpu

BN_EPS = 1e-5
LIF_TAU = 2.0
LIF_VTH = 1.0


def _round_up(v, m):
    return (v + m - 1) // m * m


def _pick_block_n(B, Np, Dp, Hp):
    """Largest multiple-of-8 divisor of Np whose per-tile activations stay small."""
    budget = 24 * 1024 * 1024  # leave pipeline/weight headroom under 48 MiB scoped VMEM
    bytes_per_row = B * (20 * Dp + 6 * Hp)  # x/out double-buffered f32 + h f32 + spikes bf16
    cap = max(8, min(256, budget // max(bytes_per_row, 1)))
    tn = 8
    for cand in range(8, min(cap, Np) + 1, 8):
        if Np % cand == 0:
            tn = cand
    return tn


def _ffn_kernel(x_ref, w1_ref, b1_ref, g1_ref, be1_ref,
                w2_ref, b2_ref, g2_ref, be2_ref, o_ref, *, h_count, d_count):
    B, TN, Dp = x_ref.shape
    Hp = w1_ref.shape[1]
    M = B * TN

    # ---- Linear(dim -> hidden) as a flat 2-D MXU contraction ----------------
    x2 = x_ref[...].reshape(M, Dp)
    h = jnp.dot(x2, w1_ref[...], preferred_element_type=jnp.float32)
    h = h + b1_ref[...]                                    # (M, Hp) + (1, Hp)
    h3 = h.reshape(B, TN, Hp)

    # ---- BN1 training-mode batch stats per channel (single pass) ------------
    # Padded feature columns are exactly zero (zero weights + zero bias), so
    # the sums are unaffected; divide by the real element count.
    inv_cnt1 = 1.0 / float(B * h_count)
    mu1 = jnp.sum(h3, axis=(0, 2), keepdims=True) * inv_cnt1          # (1,TN,1)
    ms1 = jnp.sum(h3 * h3, axis=(0, 2), keepdims=True) * inv_cnt1
    var1 = ms1 - mu1 * mu1
    scale1 = g1_ref[...].reshape(1, TN, 1) * lax.rsqrt(var1 + BN_EPS)
    shift1 = be1_ref[...].reshape(1, TN, 1) - mu1 * scale1

    # ---- BN1 affine + LIF folded: spike = (bn(h)/tau >= 1) == (bn(h) >= tau) -
    spikes = (h3 * scale1 + shift1 >= LIF_TAU).astype(jnp.bfloat16)

    # ---- Linear(hidden -> dim): bf16 spikes x bf16 weights, f32 accumulation -
    o = jnp.dot(spikes.reshape(M, Hp), w2_ref[...],
                preferred_element_type=jnp.float32)
    o = o + b2_ref[...]                                    # (M, Dp) + (1, Dp)
    o3 = o.reshape(B, TN, Dp)

    # ---- BN2 (same per-channel batch-stat normalization) --------------------
    inv_cnt2 = 1.0 / float(B * d_count)
    mu2 = jnp.sum(o3, axis=(0, 2), keepdims=True) * inv_cnt2
    ms2 = jnp.sum(o3 * o3, axis=(0, 2), keepdims=True) * inv_cnt2
    var2 = ms2 - mu2 * mu2
    scale2 = g2_ref[...].reshape(1, TN, 1) * lax.rsqrt(var2 + BN_EPS)
    shift2 = be2_ref[...].reshape(1, TN, 1) - mu2 * scale2

    o_ref[...] = (o3 * scale2 + shift2).astype(o_ref.dtype)


def feedforward_pallas(x, w1_t, b1, g1, be1, w2_t, b2, g2, be2, *, block_n=None):
    """x: [B, N, dim]; w1_t: [dim, hidden]; w2_t: [hidden, dim]; g/be: [N]."""
    B, N, D = x.shape
    H = w1_t.shape[1]
    f32 = jnp.float32

    # Lane-dense / MXU-aligned feature dims, sublane-aligned channel dim.
    Dp = _round_up(D, 128)
    Hp = _round_up(H, 128)
    Np = _round_up(N, 8)
    if block_n is None:
        block_n = _pick_block_n(B, Np, Dp, Hp)
    assert block_n % 8 == 0, "block_n must be a multiple of 8"
    TN = block_n
    Np = _round_up(Np, TN)

    # Zero-pad everything (BN sums are unaffected; padding is sliced off).
    xp = jnp.zeros((B, Np, Dp), f32).at[:, :N, :D].set(x.astype(f32))
    w1p = jnp.zeros((Dp, Hp), f32).at[:D, :H].set(w1_t.astype(f32))
    b1p = jnp.zeros((1, Hp), f32).at[0, :H].set(b1.astype(f32))
    w2p = jnp.zeros((Hp, Dp), jnp.bfloat16).at[:H, :D].set(w2_t.astype(jnp.bfloat16))
    b2p = jnp.zeros((1, Dp), f32).at[0, :D].set(b2.astype(f32))
    # gamma/beta as (Np, 1) columns: channel on sublanes, no lane->sublane move.
    col = lambda v: jnp.zeros((Np, 1), f32).at[:N, 0].set(v.astype(f32))
    g1p, be1p, g2p, be2p = col(g1), col(be1), col(g2), col(be2)

    grid = (Np // TN,)
    kernel = functools.partial(_ffn_kernel, h_count=H, d_count=D)

    out = pl.pallas_call(
        kernel,
        out_shape=jax.ShapeDtypeStruct((B, Np, Dp), f32),
        grid_spec=pltpu.PrefetchScalarGridSpec(
            num_scalar_prefetch=0,
            grid=grid,
            in_specs=[
                pl.BlockSpec((B, TN, Dp), lambda i: (0, i, 0)),   # x tile
                pl.BlockSpec((Dp, Hp), lambda i: (0, 0)),         # w1 (resident)
                pl.BlockSpec((1, Hp), lambda i: (0, 0)),          # b1 (resident)
                pl.BlockSpec((TN, 1), lambda i: (i, 0)),          # gamma1 tile
                pl.BlockSpec((TN, 1), lambda i: (i, 0)),          # beta1 tile
                pl.BlockSpec((Hp, Dp), lambda i: (0, 0)),         # w2 bf16 (resident)
                pl.BlockSpec((1, Dp), lambda i: (0, 0)),          # b2 (resident)
                pl.BlockSpec((TN, 1), lambda i: (i, 0)),          # gamma2 tile
                pl.BlockSpec((TN, 1), lambda i: (i, 0)),          # beta2 tile
            ],
            out_specs=pl.BlockSpec((B, TN, Dp), lambda i: (0, i, 0)),
        ),
        compiler_params=pltpu.CompilerParams(
            dimension_semantics=("parallel",),
            vmem_limit_bytes=48 * 1024 * 1024,
        ),
    )(xp, w1p, b1p, g1p, be1p, w2p, b2p, g2p, be2p)

    return out[:, :N, :D]


def feedforward_reference(x, w1_t, b1, g1, be1, w2_t, b2, g2, be2):
    """Pure-JAX (f32) reference of the same forward pass."""
    h = jnp.einsum("bnd,dh->bnh", x, w1_t) + b1
    mu = h.mean(axis=(0, 2), keepdims=True)
    var = ((h - mu) ** 2).mean(axis=(0, 2), keepdims=True)
    hn = (h - mu) / jnp.sqrt(var + BN_EPS) * g1[None, :, None] + be1[None, :, None]
    s = ((hn / LIF_TAU) >= LIF_VTH).astype(jnp.float32)
    o = jnp.einsum("bnh,hd->bnd", s, w2_t) + b2
    mu2 = o.mean(axis=(0, 2), keepdims=True)
    var2 = ((o - mu2) ** 2).mean(axis=(0, 2), keepdims=True)
    return (o - mu2) / jnp.sqrt(var2 + BN_EPS) * g2[None, :, None] + be2[None, :, None]


if __name__ == "__main__":
    # Small shapes consistent with the module: x is [B, bn_dim, dim].
    B, bn_dim, dim, hidden_dim = 2, 16, 32, 64

    key = jax.random.PRNGKey(0)
    kx, kw1, kb1, kw2, kb2 = jax.random.split(key, 5)

    x = jax.random.normal(kx, (B, bn_dim, dim), dtype=jnp.float32)

    lim1 = 1.0 / jnp.sqrt(dim)
    w1_t = jax.random.uniform(kw1, (dim, hidden_dim), minval=-lim1, maxval=lim1)
    b1 = jax.random.uniform(kb1, (hidden_dim,), minval=-lim1, maxval=lim1)
    lim2 = 1.0 / jnp.sqrt(hidden_dim)
    w2_t = jax.random.uniform(kw2, (hidden_dim, dim), minval=-lim2, maxval=lim2)
    b2 = jax.random.uniform(kb2, (dim,), minval=-lim2, maxval=lim2)

    g1 = 1.5 + 0.1 * jnp.arange(bn_dim, dtype=jnp.float32)
    be1 = 0.05 * jnp.arange(bn_dim, dtype=jnp.float32)
    g2 = 1.0 + 0.02 * jnp.arange(bn_dim, dtype=jnp.float32)
    be2 = -0.03 * jnp.arange(bn_dim, dtype=jnp.float32)

    # block_n=8 exercises the multi-tile pipelined path (grid=(2,)).
    out = feedforward_pallas(x, w1_t, b1, g1, be1, w2_t, b2, g2, be2, block_n=8)
    out = jax.block_until_ready(out)

    ref = feedforward_reference(x, w1_t, b1, g1, be1, w2_t, b2, g2, be2)
    assert out.shape == (B, bn_dim, dim)
    # Second matmul uses bf16 weights (spikes are exact) with f32 accumulation,
    # so tolerance is loosened vs the pure-f32 reference.
    assert jnp.allclose(out, ref, atol=1e-2, rtol=1e-2), "mismatch vs reference"

    print("KERNEL_OK")
</pallas_src>

<mosaic_0001>
module attributes {stable_mosaic.version = 11 : i64} {
  func.func @_ffn_kernel(%arg0: i32, %arg1: memref<2x8x128xf32, #tpu.memory_space<vmem>>, %arg2: memref<128x128xf32, #tpu.memory_space<vmem>>, %arg3: memref<1x128xf32, #tpu.memory_space<vmem>>, %arg4: memref<8x1xf32, #tpu.memory_space<vmem>>, %arg5: memref<8x1xf32, #tpu.memory_space<vmem>>, %arg6: memref<128x128xbf16, #tpu.memory_space<vmem>>, %arg7: memref<1x128xf32, #tpu.memory_space<vmem>>, %arg8: memref<8x1xf32, #tpu.memory_space<vmem>>, %arg9: memref<8x1xf32, #tpu.memory_space<vmem>>, %arg10: memref<2x8x128xf32, #tpu.memory_space<vmem>>) attributes {dimension_semantics = [#tpu.dimension_semantics<parallel>], iteration_bounds = array<i64: 2>, scalar_prefetch = 0 : i64, scratch_operands = 0 : i64, tpu.core_type = #tpu.core_type<tc>, window_params = [{transform_indices = @transform_0, window_bounds = array<i64: 2, 8, 128>}, {pipeline_mode = #tpu.pipeline_mode<synchronous>, transform_indices = @transform_1, window_bounds = array<i64: 128, 128>}, {pipeline_mode = #tpu.pipeline_mode<synchronous>, transform_indices = @transform_2, window_bounds = array<i64: 1, 128>}, {transform_indices = @transform_3, window_bounds = array<i64: 8, 1>}, {transform_indices = @transform_4, window_bounds = array<i64: 8, 1>}, {pipeline_mode = #tpu.pipeline_mode<synchronous>, transform_indices = @transform_5, window_bounds = array<i64: 128, 128>}, {pipeline_mode = #tpu.pipeline_mode<synchronous>, transform_indices = @transform_6, window_bounds = array<i64: 1, 128>}, {transform_indices = @transform_7, window_bounds = array<i64: 8, 1>}, {transform_indices = @transform_8, window_bounds = array<i64: 8, 1>}, {transform_indices = @transform_9, window_bounds = array<i64: 2, 8, 128>}]} {
    %c0 = arith.constant 0 : index
    %c0_0 = arith.constant 0 : index
    %c0_1 = arith.constant 0 : index
    %0 = vector.load %arg1[%c0, %c0_0, %c0_1] : memref<2x8x128xf32, #tpu.memory_space<vmem>>, vector<2x8x128xf32>
    %1 = vector.shape_cast %0 : vector<2x8x128xf32> to vector<16x128xf32>
    %c0_2 = arith.constant 0 : index
    %c0_3 = arith.constant 0 : index
    %2 = vector.load %arg2[%c0_2, %c0_3] : memref<128x128xf32, #tpu.memory_space<vmem>>, vector<128x128xf32>
    %cst = arith.constant dense<0.000000e+00> : vector<16x128xf32>
    %3 = tpu.matmul %1, %2, %cst {dimension_numbers = #tpu.dot_dimension_numbers<[1], [0], [0], [1], [0, 0, 1, 1], [], []>} : vector<16x128xf32>, vector<128x128xf32>, vector<16x128xf32> -> vector<16x128xf32>
    %c0_4 = arith.constant 0 : index
    %c0_5 = arith.constant 0 : index
    %4 = vector.load %arg3[%c0_4, %c0_5] : memref<1x128xf32, #tpu.memory_space<vmem>>, vector<1x128xf32>
    %5 = vector.broadcast %4 : vector<1x128xf32> to vector<16x128xf32>
    %6 = arith.addf %3, %5 : vector<16x128xf32>
    %7 = vector.shape_cast %6 : vector<16x128xf32> to vector<2x8x128xf32>
    %cst_6 = arith.constant dense<0.000000e+00> : vector<8xf32>
    %8 = vector.multi_reduction <add>, %7, %cst_6 [0, 2] : vector<2x8x128xf32> to vector<8xf32>
    %9 = vector.shape_cast %8 : vector<8xf32> to vector<1x8x1xf32>
    %cst_7 = arith.constant 7.812500e-03 : f32
    %10 = vector.broadcast %cst_7 : f32 to vector<1x8x1xf32>
    %11 = arith.mulf %9, %10 : vector<1x8x1xf32>
    %12 = arith.mulf %7, %7 : vector<2x8x128xf32>
    %cst_8 = arith.constant dense<0.000000e+00> : vector<8xf32>
    %13 = vector.multi_reduction <add>, %12, %cst_8 [0, 2] : vector<2x8x128xf32> to vector<8xf32>
    %14 = vector.shape_cast %13 : vector<8xf32> to vector<1x8x1xf32>
    %cst_9 = arith.constant 7.812500e-03 : f32
    %15 = vector.broadcast %cst_9 : f32 to vector<1x8x1xf32>
    %16 = arith.mulf %14, %15 : vector<1x8x1xf32>
    %17 = arith.mulf %11, %11 : vector<1x8x1xf32>
    %18 = arith.subf %16, %17 : vector<1x8x1xf32>
    %c0_10 = arith.constant 0 : index
    %c0_11 = arith.constant 0 : index
    %19 = vector.load %arg4[%c0_10, %c0_11] : memref<8x1xf32, #tpu.memory_space<vmem>>, vector<8x1xf32>
    %20 = vector.shape_cast %19 : vector<8x1xf32> to vector<1x8x1xf32>
    %cst_12 = arith.constant 9.99999974E-6 : f32
    %21 = vector.broadcast %cst_12 : f32 to vector<1x8x1xf32>
    %22 = arith.addf %18, %21 : vector<1x8x1xf32>
    %23 = math.rsqrt %22 : vector<1x8x1xf32>
    %24 = arith.mulf %20, %23 : vector<1x8x1xf32>
    %c0_13 = arith.constant 0 : index
    %c0_14 = arith.constant 0 : index
    %25 = vector.load %arg5[%c0_13, %c0_14] : memref<8x1xf32, #tpu.memory_space<vmem>>, vector<8x1xf32>
    %26 = vector.shape_cast %25 : vector<8x1xf32> to vector<1x8x1xf32>
    %27 = arith.mulf %11, %24 : vector<1x8x1xf32>
    %28 = arith.subf %26, %27 : vector<1x8x1xf32>
    %29 = vector.broadcast %24 : vector<1x8x1xf32> to vector<2x8x128xf32>
    %30 = arith.mulf %7, %29 : vector<2x8x128xf32>
    %31 = vector.broadcast %28 : vector<1x8x1xf32> to vector<2x8x128xf32>
    %32 = arith.addf %30, %31 : vector<2x8x128xf32>
    %cst_15 = arith.constant 2.000000e+00 : f32
    %33 = vector.broadcast %cst_15 : f32 to vector<2x8x128xf32>
    %34 = arith.cmpf oge, %32, %33 : vector<2x8x128xf32>
    %35 = arith.extui %34 : vector<2x8x128xi1> to vector<2x8x128xi32>
    %36 = arith.sitofp %35 : vector<2x8x128xi32> to vector<2x8x128xf32>
    %37 = arith.truncf %36 : vector<2x8x128xf32> to vector<2x8x128xbf16>
    %38 = vector.shape_cast %37 : vector<2x8x128xbf16> to vector<16x128xbf16>
    %c0_16 = arith.constant 0 : index
    %c0_17 = arith.constant 0 : index
    %39 = vector.load %arg6[%c0_16, %c0_17] : memref<128x128xbf16, #tpu.memory_space<vmem>>, vector<128x128xbf16>
    %cst_18 = arith.constant dense<0.000000e+00> : vector<16x128xf32>
    %40 = tpu.matmul %38, %39, %cst_18 {dimension_numbers = #tpu.dot_dimension_numbers<[1], [0], [0], [1], [0, 0, 1, 1], [], []>} : vector<16x128xbf16>, vector<128x128xbf16>, vector<16x128xf32> -> vector<16x128xf32>
    %c0_19 = arith.constant 0 : index
    %c0_20 = arith.constant 0 : index
    %41 = vector.load %arg7[%c0_19, %c0_20] : memref<1x128xf32, #tpu.memory_space<vmem>>, vector<1x128xf32>
    %42 = vector.broadcast %41 : vector<1x128xf32> to vector<16x128xf32>
    %43 = arith.addf %40, %42 : vector<16x128xf32>
    %44 = vector.shape_cast %43 : vector<16x128xf32> to vector<2x8x128xf32>
    %cst_21 = arith.constant dense<0.000000e+00> : vector<8xf32>
    %45 = vector.multi_reduction <add>, %44, %cst_21 [0, 2] : vector<2x8x128xf32> to vector<8xf32>
    %46 = vector.shape_cast %45 : vector<8xf32> to vector<1x8x1xf32>
    %cst_22 = arith.constant 1.562500e-02 : f32
    %47 = vector.broadcast %cst_22 : f32 to vector<1x8x1xf32>
    %48 = arith.mulf %46, %47 : vector<1x8x1xf32>
    %49 = arith.mulf %44, %44 : vector<2x8x128xf32>
    %cst_23 = arith.constant dense<0.000000e+00> : vector<8xf32>
    %50 = vector.multi_reduction <add>, %49, %cst_23 [0, 2] : vector<2x8x128xf32> to vector<8xf32>
    %51 = vector.shape_cast %50 : vector<8xf32> to vector<1x8x1xf32>
    %cst_24 = arith.constant 1.562500e-02 : f32
    %52 = vector.broadcast %cst_24 : f32 to vector<1x8x1xf32>
    %53 = arith.mulf %51, %52 : vector<1x8x1xf32>
    %54 = arith.mulf %48, %48 : vector<1x8x1xf32>
    %55 = arith.subf %53, %54 : vector<1x8x1xf32>
    %c0_25 = arith.constant 0 : index
    %c0_26 = arith.constant 0 : index
    %56 = vector.load %arg8[%c0_25, %c0_26] : memref<8x1xf32, #tpu.memory_space<vmem>>, vector<8x1xf32>
    %57 = vector.shape_cast %56 : vector<8x1xf32> to vector<1x8x1xf32>
    %cst_27 = arith.constant 9.99999974E-6 : f32
    %58 = vector.broadcast %cst_27 : f32 to vector<1x8x1xf32>
    %59 = arith.addf %55, %58 : vector<1x8x1xf32>
    %60 = math.rsqrt %59 : vector<1x8x1xf32>
    %61 = arith.mulf %57, %60 : vector<1x8x1xf32>
    %c0_28 = arith.constant 0 : index
    %c0_29 = arith.constant 0 : index
    %62 = vector.load %arg9[%c0_28, %c0_29] : memref<8x1xf32, #tpu.memory_space<vmem>>, vector<8x1xf32>
    %63 = vector.shape_cast %62 : vector<8x1xf32> to vector<1x8x1xf32>
    %64 = arith.mulf %48, %61 : vector<1x8x1xf32>
    %65 = arith.subf %63, %64 : vector<1x8x1xf32>
    %66 = vector.broadcast %61 : vector<1x8x1xf32> to vector<2x8x128xf32>
    %67 = arith.mulf %44, %66 : vector<2x8x128xf32>
    %68 = vector.broadcast %65 : vector<1x8x1xf32> to vector<2x8x128xf32>
    %69 = arith.addf %67, %68 : vector<2x8x128xf32>
    %c0_30 = arith.constant 0 : index
    %c0_31 = arith.constant 0 : index
    %c0_32 = arith.constant 0 : index
    %70 = vector.load %arg10[%c0_30, %c0_31, %c0_32] : memref<2x8x128xf32, #tpu.memory_space<vmem>>, vector<2x8x128xf32>
    tpu.vector_store %arg10[%c0_30, %c0_31, %c0_32], %69 {strides = array<i32>} : memref<2x8x128xf32, #tpu.memory_space<vmem>>, vector<2x8x128xf32>,
    return
  }
  func.func @transform_0(%arg0: i32) -> (i32, i32, i32) {
    %c0_i32 = arith.constant 0 : i32
    %c0_i32_0 = arith.constant 0 : i32
    %c0_i32_1 = arith.constant 0 : i32
    return %c0_i32, %arg0, %c0_i32_0 : i32, i32, i32
  }
  func.func @transform_1(%arg0: i32) -> (i32, i32) {
    %c0_i32 = arith.constant 0 : i32
    %c0_i32_0 = arith.constant 0 : i32
    %c0_i32_1 = arith.constant 0 : i32
    return %c0_i32, %c0_i32_0 : i32, i32
  }
  func.func @transform_2(%arg0: i32) -> (i32, i32) {
    %c0_i32 = arith.constant 0 : i32
    %c0_i32_0 = arith.constant 0 : i32
    %c0_i32_1 = arith.constant 0 : i32
    return %c0_i32, %c0_i32_0 : i32, i32
  }
  func.func @transform_3(%arg0: i32) -> (i32, i32) {
    %c0_i32 = arith.constant 0 : i32
    %c0_i32_0 = arith.constant 0 : i32
    return %arg0, %c0_i32 : i32, i32
  }
  func.func @transform_4(%arg0: i32) -> (i32, i32) {
    %c0_i32 = arith.constant 0 : i32
    %c0_i32_0 = arith.constant 0 : i32
    return %arg0, %c0_i32 : i32, i32
  }
  func.func @transform_5(%arg0: i32) -> (i32, i32) {
    %c0_i32 = arith.constant 0 : i32
    %c0_i32_0 = arith.constant 0 : i32
    %c0_i32_1 = arith.constant 0 : i32
    return %c0_i32, %c0_i32_0 : i32, i32
  }
  func.func @transform_6(%arg0: i32) -> (i32, i32) {
    %c0_i32 = arith.constant 0 : i32
    %c0_i32_0 = arith.constant 0 : i32
    %c0_i32_1 = arith.constant 0 : i32
    return %c0_i32, %c0_i32_0 : i32, i32
  }
  func.func @transform_7(%arg0: i32) -> (i32, i32) {
    %c0_i32 = arith.constant 0 : i32
    %c0_i32_0 = arith.constant 0 : i32
    return %arg0, %c0_i32 : i32, i32
  }
  func.func @transform_8(%arg0: i32) -> (i32, i32) {
    %c0_i32 = arith.constant 0 : i32
    %c0_i32_0 = arith.constant 0 : i32
    return %arg0, %c0_i32 : i32, i32
  }
  func.func @transform_9(%arg0: i32) -> (i32, i32, i32) {
    %c0_i32 = arith.constant 0 : i32
    %c0_i32_0 = arith.constant 0 : i32
    %c0_i32_1 = arith.constant 0 : i32
    return %c0_i32, %arg0, %c0_i32_0 : i32, i32, i32
  }
}

</mosaic_0001>

<llo_original>
// kernel: tpu_custom_call.1
$region0: #{tpu_custom_call.1}
  #allocation0 [shape = 'u32[]', space=smem, size = 0x4, offset = 0x4, fixed_abs, tag = 'smem constant byte address 0x4 - core index']
  #allocation1 [shape = 'u32[144,128]{1,0:T(1,128)}', space=vmem, size = 0x12000, scoped, tag = 'internal scratch']
  %s0 = inlined_call_operand.hbm [shape: f32[2,16,128], index: 0, kind: input, shape index: {}]
  %s1 = inlined_call_operand.hbm [shape: f32[128,128], index: 1, kind: input, shape index: {}]
  %s2 = inlined_call_operand.vmem [shape: f32[1,128], index: 2, kind: input, shape index: {}]
  %s3 = inlined_call_operand.vmem [shape: f32[16,1], index: 3, kind: input, shape index: {}]
  %s4 = inlined_call_operand.vmem [shape: f32[16,1], index: 4, kind: input, shape index: {}]
  %s5 = inlined_call_operand.vmem [shape: bf16[128,128], index: 5, kind: input, shape index: {}]
  %s6 = inlined_call_operand.vmem [shape: f32[1,128], index: 6, kind: input, shape index: {}]
  %s7 = inlined_call_operand.vmem [shape: f32[16,1], index: 7, kind: input, shape index: {}]
  %s8 = inlined_call_operand.vmem [shape: f32[16,1], index: 8, kind: input, shape index: {}]
  %s9 = inlined_call_operand.hbm [shape: f32[2,16,128], index: 9, kind: output, shape index: {}]
  %s10 = sld [smem:[#allocation0]]
  $region77: #{tpu_custom_call.1} parent=0
    _
  %s12 = ssub.s32 1, %s10
  %s13 = scalar_select 0, %s12, %s10
  $region1: #{tpu_custom_call.1} parent=0
    #allocation2 [shape = 'u8[16384]{0}', space=vmem, size = 0x4000, scoped, tag = 'input window, operand 0']
    #allocation3 [shape = 's32[2]{0}', space=sflag, size = 0x8, scoped, tag = 'scoped memory for tpu_custom_call.1']
    #allocation4 [shape = 's32[2]{0}', space=sflag, size = 0x8, scoped, tag = 'scoped memory for tpu_custom_call.1']
    #allocation5 [shape = 'u8[65536]{0}', space=vmem, size = 0x10000, scoped, tag = 'input window, operand 1, single buffered']
    #allocation6 [shape = 's32[1]{0}', space=sflag, size = 0x4, scoped, tag = 'scoped memory for tpu_custom_call.1']
    #allocation7 [shape = 'u8[16384]{0}', space=vmem, size = 0x4000, scoped, tag = 'output window, operand 0']
    %14 = vsyncpa [#allocation3], 0
    %s15 = scalar_lea.sflag [#allocation3], 1
    %16 = vsyncpa %s15, 0
    %17 = vsyncpa [#allocation6], 0
    %18 = vsyncpa [#allocation4], 0
    %s19 = scalar_lea.sflag [#allocation4], 1
    %20 = vsyncpa %s19, 0
    loop: start=0, step=1, limit=4
    $region2: #{tpu_custom_call.1} parent=1 // loop_pre_header
      _
    $region3: #{tpu_custom_call.1} parent=1 // loop_header
      %s22 = sphi 0, %s26
      %p23 = scmp.ge.s32.totalorder %s22, 4
      %s32 = sphi 0, %s34
      %s35 = sphi 0, %s32
      %s36 = sphi 0, %s35
      %s52 = sphi 0, %s36
      %s56 = sphi 0, %s56
      %s58 = sphi 0, %s56
      %s59 = sphi 0, %s58
      %s73 = sphi 0, %s59
      %s77 = sphi 0, %s77
      %s79 = sphi 0, %s77
      %s80 = sphi 0, %s79
      %s94 = sphi 0, %s80
      %s100 = sphi 0, %s102
      %s103 = sphi 0, %s100
      %s104 = sphi 0, %s103
      %s120 = sphi 0, %s104
      %s126 = sphi 0, %s128
      %s129 = sphi 0, %s126
      %s130 = sphi 0, %s129
      %s146 = sphi 0, %s130
      %s150 = sphi 0, %s150
      %s152 = sphi 0, %s150
      %s153 = sphi 0, %s152
      %s167 = sphi 0, %s153
      %s171 = sphi 0, %s171
      %s173 = sphi 0, %s171
      %s174 = sphi 0, %s173
      %s188 = sphi 0, %s174
      %s194 = sphi 0, %s196
      %s197 = sphi 0, %s194
      %s198 = sphi 0, %s197
      %s214 = sphi 0, %s198
      %s220 = sphi 0, %s222
      %s223 = sphi 0, %s220
      %s224 = sphi 0, %s223
      %s240 = sphi 0, %s224
      %s246 = sphi 0, %s248
      %s249 = sphi 0, %s246
      %s250 = sphi 0, %s249
      %s266 = sphi 0, %s250
    $region4: #{tpu_custom_call.1} parent=1 // loop_header_branch
      %25 = sbr.rel (%p23) target = $region8
    $region5: #{tpu_custom_call.1} parent=1 // loop_body
      %s27 = ssub.s32 %s22, 1
      %s28 = ssub.s32 %s22, 2
      %s29 = sadd.s32 %s22, 1
      %s30 = ssub.s32 %s22, %s29
      %p31 = scmp.eq.s32.totalorder %s30, 0
      %s33 = sadd.s32 %s32, 1
      %s34 = scalar_select %p31, %s32, %s33
      %p37 = pneg %p31
      %p38 = scmp.eq.s32.totalorder %s22, 1
      %p39 = por %p37, %p38
      %p40 = scmp.ne.s32.totalorder %s32, %s35
      %p41 = scmp.eq.s32.totalorder %s22, 0
      %p42 = por %p40, %p41
      %p43 = scmp.ne.s32.totalorder %s32, %s35
      %p44 = scmp.eq.s32.totalorder %s27, 1
      %p45 = por %p43, %p44
      %p46 = scmp.ne.s32.totalorder %s35, %s36
      %p47 = scmp.eq.s32.totalorder %s27, 0
      %p48 = por %p46, %p47
      %p49 = scmp.ne.s32.totalorder %s35, %s36
      %p50 = scmp.eq.s32.totalorder %s28, 1
      %p51 = por %p49, %p50
      %p53 = scmp.ne.s32.totalorder %s36, %s52
      %p54 = scmp.eq.s32.totalorder %s28, 0
      %p55 = por %p53, %p54
      %s57 = sadd.s32 %s56, 1
      %p60 = scmp.eq.s32.totalorder %s22, 1
      %p61 = scmp.ne.s32.totalorder %s56, %s58
      %p62 = scmp.eq.s32.totalorder %s22, 0
      %p63 = por %p61, %p62
      %p64 = scmp.ne.s32.totalorder %s56, %s58
      %p65 = scmp.eq.s32.totalorder %s27, 1
      %p66 = por %p64, %p65
      %p67 = scmp.ne.s32.totalorder %s58, %s59
      %p68 = scmp.eq.s32.totalorder %s27, 0
      %p69 = por %p67, %p68
      %p70 = scmp.ne.s32.totalorder %s58, %s59
      %p71 = scmp.eq.s32.totalorder %s28, 1
      %p72 = por %p70, %p71
      %p74 = scmp.ne.s32.totalorder %s59, %s73
      %p75 = scmp.eq.s32.totalorder %s28, 0
      %p76 = por %p74, %p75
      %s78 = sadd.s32 %s77, 1
      %p81 = scmp.eq.s32.totalorder %s22, 1
      %p82 = scmp.ne.s32.totalorder %s77, %s79
      %p83 = scmp.eq.s32.totalorder %s22, 0
      %p84 = por %p82, %p83
      %p85 = scmp.ne.s32.totalorder %s77, %s79
      %p86 = scmp.eq.s32.totalorder %s27, 1
      %p87 = por %p85, %p86
      %p88 = scmp.ne.s32.totalorder %s79, %s80
      %p89 = scmp.eq.s32.totalorder %s27, 0
      %p90 = por %p88, %p89
      %p91 = scmp.ne.s32.totalorder %s79, %s80
      %p92 = scmp.eq.s32.totalorder %s28, 1
      %p93 = por %p91, %p92
      %p95 = scmp.ne.s32.totalorder %s80, %s94
      %p96 = scmp.eq.s32.totalorder %s28, 0
      %p97 = por %p95, %p96
      %s98 = ssub.s32 %s22, %s29
      %p99 = scmp.eq.s32.totalorder %s98, 0
      %s101 = sadd.s32 %s100, 1
      %s102 = scalar_select %p99, %s100, %s101
      %p105 = pneg %p99
      %p106 = scmp.eq.s32.totalorder %s22, 1
      %p107 = por %p105, %p106
      %p108 = scmp.ne.s32.totalorder %s100, %s103
      %p109 = scmp.eq.s32.totalorder %s22, 0
      %p110 = por %p108, %p109
      %p111 = scmp.ne.s32.totalorder %s100, %s103
      %p112 = scmp.eq.s32.totalorder %s27, 1
      %p113 = por %p111, %p112
      %p114 = scmp.ne.s32.totalorder %s103, %s104
      %p115 = scmp.eq.s32.totalorder %s27, 0
      %p116 = por %p114, %p115
      %p117 = scmp.ne.s32.totalorder %s103, %s104
      %p118 = scmp.eq.s32.totalorder %s28, 1
      %p119 = por %p117, %p118
      %p121 = scmp.ne.s32.totalorder %s104, %s120
      %p122 = scmp.eq.s32.totalorder %s28, 0
      %p123 = por %p121, %p122
      %s124 = ssub.s32 %s22, %s29
      %p125 = scmp.eq.s32.totalorder %s124, 0
      %s127 = sadd.s32 %s126, 1
      %s128 = scalar_select %p125, %s126, %s127
      %p131 = pneg %p125
      %p132 = scmp.eq.s32.totalorder %s22, 1
      %p133 = por %p131, %p132
      %p134 = scmp.ne.s32.totalorder %s126, %s129
      %p135 = scmp.eq.s32.totalorder %s22, 0
      %p136 = por %p134, %p135
      %p137 = scmp.ne.s32.totalorder %s126, %s129
      %p138 = scmp.eq.s32.totalorder %s27, 1
      %p139 = por %p137, %p138
      %p140 = scmp.ne.s32.totalorder %s129, %s130
      %p141 = scmp.eq.s32.totalorder %s27, 0
      %p142 = por %p140, %p141
      %p143 = scmp.ne.s32.totalorder %s129, %s130
      %p144 = scmp.eq.s32.totalorder %s28, 1
      %p145 = por %p143, %p144
      %p147 = scmp.ne.s32.totalorder %s130, %s146
      %p148 = scmp.eq.s32.totalorder %s28, 0
      %p149 = por %p147, %p148
      %s151 = sadd.s32 %s150, 1
      %p154 = scmp.eq.s32.totalorder %s22, 1
      %p155 = scmp.ne.s32.totalorder %s150, %s152
      %p156 = scmp.eq.s32.totalorder %s22, 0
      %p157 = por %p155, %p156
      %p158 = scmp.ne.s32.totalorder %s150, %s152
      %p159 = scmp.eq.s32.totalorder %s27, 1
      %p160 = por %p158, %p159
      %p161 = scmp.ne.s32.totalorder %s152, %s153
      %p162 = scmp.eq.s32.totalorder %s27, 0
      %p163 = por %p161, %p162
      %p164 = scmp.ne.s32.totalorder %s152, %s153
      %p165 = scmp.eq.s32.totalorder %s28, 1
      %p166 = por %p164, %p165
      %p168 = scmp.ne.s32.totalorder %s153, %s167
      %p169 = scmp.eq.s32.totalorder %s28, 0
      %p170 = por %p168, %p169
      %s172 = sadd.s32 %s171, 1
      %p175 = scmp.eq.s32.totalorder %s22, 1
      %p176 = scmp.ne.s32.totalorder %s171, %s173
      %p177 = scmp.eq.s32.totalorder %s22, 0
      %p178 = por %p176, %p177
      %p179 = scmp.ne.s32.totalorder %s171, %s173
      %p180 = scmp.eq.s32.totalorder %s27, 1
      %p181 = por %p179, %p180
      %p182 = scmp.ne.s32.totalorder %s173, %s174
      %p183 = scmp.eq.s32.totalorder %s27, 0
      %p184 = por %p182, %p183
      %p185 = scmp.ne.s32.totalorder %s173, %s174
      %p186 = scmp.eq.s32.totalorder %s28, 1
      %p187 = por %p185, %p186
      %p189 = scmp.ne.s32.totalorder %s174, %s188
      %p190 = scmp.eq.s32.totalorder %s28, 0
      %p191 = por %p189, %p190
      %s192 = ssub.s32 %s22, %s29
      %p193 = scmp.eq.s32.totalorder %s192, 0
      %s195 = sadd.s32 %s194, 1
      %s196 = scalar_select %p193, %s194, %s195
      %p199 = pneg %p193
      %p200 = scmp.eq.s32.totalorder %s22, 1
      %p201 = por %p199, %p200
      %p202 = scmp.ne.s32.totalorder %s194, %s197
      %p203 = scmp.eq.s32.totalorder %s22, 0
      %p204 = por %p202, %p203
      %p205 = scmp.ne.s32.totalorder %s194, %s197
      %p206 = scmp.eq.s32.totalorder %s27, 1
      %p207 = por %p205, %p206
      %p208 = scmp.ne.s32.totalorder %s197, %s198
      %p209 = scmp.eq.s32.totalorder %s27, 0
      %p210 = por %p208, %p209
      %p211 = scmp.ne.s32.totalorder %s197, %s198
      %p212 = scmp.eq.s32.totalorder %s28, 1
      %p213 = por %p211, %p212
      %p215 = scmp.ne.s32.totalorder %s198, %s214
      %p216 = scmp.eq.s32.totalorder %s28, 0
      %p217 = por %p215, %p216
      %s218 = ssub.s32 %s22, %s29
      %p219 = scmp.eq.s32.totalorder %s218, 0
      %s221 = sadd.s32 %s220, 1
      %s222 = scalar_select %p219, %s220, %s221
      %p225 = pneg %p219
      %p226 = scmp.eq.s32.totalorder %s22, 1
      %p227 = por %p225, %p226
      %p228 = scmp.ne.s32.totalorder %s220, %s223
      %p229 = scmp.eq.s32.totalorder %s22, 0
      %p230 = por %p228, %p229
      %p231 = scmp.ne.s32.totalorder %s220, %s223
      %p232 = scmp.eq.s32.totalorder %s27, 1
      %p233 = por %p231, %p232
      %p234 = scmp.ne.s32.totalorder %s223, %s224
      %p235 = scmp.eq.s32.totalorder %s27, 0
      %p236 = por %p234, %p235
      %p237 = scmp.ne.s32.totalorder %s223, %s224
      %p238 = scmp.eq.s32.totalorder %s28, 1
      %p239 = por %p237, %p238
      %p241 = scmp.ne.s32.totalorder %s224, %s240
      %p242 = scmp.eq.s32.totalorder %s28, 0
      %p243 = por %p241, %p242
      %s244 = ssub.s32 %s22, %s29
      %p245 = scmp.eq.s32.totalorder %s244, 0
      %s247 = sadd.s32 %s246, 1
      %s248 = scalar_select %p245, %s246, %s247
      %p251 = pneg %p245
      %p252 = scmp.eq.s32.totalorder %s22, 1
      %p253 = por %p251, %p252
      %p254 = scmp.ne.s32.totalorder %s246, %s249
      %p255 = scmp.eq.s32.totalorder %s22, 0
      %p256 = por %p254, %p255
      %p257 = scmp.ne.s32.totalorder %s246, %s249
      %p258 = scmp.eq.s32.totalorder %s27, 1
      %p259 = por %p257, %p258
      %p260 = scmp.ne.s32.totalorder %s249, %s250
      %p261 = scmp.eq.s32.totalorder %s27, 0
      %p262 = por %p260, %p261
      %p263 = scmp.ne.s32.totalorder %s249, %s250
      %p264 = scmp.eq.s32.totalorder %s28, 1
      %p265 = por %p263, %p264
      %p267 = scmp.ne.s32.totalorder %s250, %s266
      %p268 = scmp.eq.s32.totalorder %s28, 0
      %p269 = por %p267, %p268
      %p270 = scmp.le.s32.totalorder 1, %s22
      %p271 = scmp.lt.s32.totalorder %s22, 3
      %p272 = pnand %p270, %p271
      %p273 = pneg %p272
      // Predicated region
      $region9: #{tpu_custom_call.1} parent=5 // pred_check
        _
      $region10: #{tpu_custom_call.1} parent=5 // pred_check_branch
        %275 = sbr.rel (%p272) target = $region12
      $region11: #{tpu_custom_call.1} parent=5 // pred_region
        %s276 = ssub.s32 %s22, 1
        // Predicated region
        $region13: #{tpu_custom_call.1} parent=11 // pred_check
          %p277 = pneg %p69
        $region14: #{tpu_custom_call.1} parent=11 // pred_check_branch
          %279 = sbr.rel (%p277) target = $region16
        $region15: #{tpu_custom_call.1} parent=11 // pred_region
          %s281 = ssub.s32 2048, 2048
          %282 = vsyncadd [#allocation6], %s281
          %s283 = sshll.u32 [#allocation5], 4
          %s284 = int_to_ptr.vmem [resolvable:$true] %s283
          %289 = dma.hbm_to_vmem [thread:$0]  %s1, 2048, %s284, [#allocation6], 128, 128, 8
        $region16: #{tpu_custom_call.1} parent=11 // pred_fallthru
          _
        // Predicated region
        $region17: #{tpu_custom_call.1} parent=11 // pred_check
          %p290 = pneg %p90
        $region18: #{tpu_custom_call.1} parent=11 // pred_check_branch
          %292 = sbr.rel (%p290) target = $region20
        $region19: #{tpu_custom_call.1} parent=11 // pred_region
          _
        $region20: #{tpu_custom_call.1} parent=11 // pred_fallthru
          _
        // Predicated region
        $region21: #{tpu_custom_call.1} parent=11 // pred_check
          %p293 = pneg %p163
        $region22: #{tpu_custom_call.1} parent=11 // pred_check_branch
          %295 = sbr.rel (%p293) target = $region24
        $region23: #{tpu_custom_call.1} parent=11 // pred_region
          _
        $region24: #{tpu_custom_call.1} parent=11 // pred_fallthru
          _
        // Predicated region
        $region25: #{tpu_custom_call.1} parent=11 // pred_check
          %p296 = pneg %p184
        $region26: #{tpu_custom_call.1} parent=11 // pred_check_branch
          %298 = sbr.rel (%p296) target = $region28
        $region27: #{tpu_custom_call.1} parent=11 // pred_region
          _
        $region28: #{tpu_custom_call.1} parent=11 // pred_fallthru
          _
      $region12: #{tpu_custom_call.1} parent=5 // pred_fallthru
        _
      %p299 = scmp.lt.s32.totalorder %s22, 2
      // Predicated region
      $region29: #{tpu_custom_call.1} parent=5 // pred_check
        %p300 = pneg %p299
      $region30: #{tpu_custom_call.1} parent=5 // pred_check_branch
        %302 = sbr.rel (%p300) target = $region32
      $region31: #{tpu_custom_call.1} parent=5 // pred_region
        // Predicated region
        $region33: #{tpu_custom_call.1} parent=31 // pred_check
          %p303 = pneg %p42
        $region34: #{tpu_custom_call.1} parent=31 // pred_check_branch
          %305 = sbr.rel (%p303) target = $region36
        $region35: #{tpu_custom_call.1} parent=31 // pred_region
          %s306 = sand.u32 %s32, 1
          %s307 = scalar_lea.sflag [#allocation3], %s306
          %s308 = sand.u32 %s32, 1
          %s309 = smul.addr %s308, 16
          %s310 = scalar_lea.vmem [#allocation2], %s309
          %s312 = ssub.s32 256, 256
          %313 = vsyncadd %s307, %s312
          %s314 = smul.addr %s22, 128
          %s315 = scalar_lea.hbm %s0, %s314
          %s316 = sshll.u32 %s310, 4
          %s317 = int_to_ptr.vmem [resolvable:$true] %s316
          %322 = dma.hbm_to_vmem [thread:$0]  %s315, 256, %s317, %s307, 256, 128, 8
        $region36: #{tpu_custom_call.1} parent=31 // pred_fallthru
          _
        // Predicated region
        $region37: #{tpu_custom_call.1} parent=31 // pred_check
          %p323 = pneg %p110
        $region38: #{tpu_custom_call.1} parent=31 // pred_check_branch
          %325 = sbr.rel (%p323) target = $region40
        $region39: #{tpu_custom_call.1} parent=31 // pred_region
          %p326 = scmp.lt.s32.totalorder %s22, 1
          %s327 = scalar_select %p326, %s22, 1
          %s328 = smul.addr %s327, 8
          %s329 = scalar_lea.vmem %s3, %s328
        $region40: #{tpu_custom_call.1} parent=31 // pred_fallthru
          _
        // Predicated region
        $region41: #{tpu_custom_call.1} parent=31 // pred_check
          %p330 = pneg %p136
        $region42: #{tpu_custom_call.1} parent=31 // pred_check_branch
          %332 = sbr.rel (%p330) target = $region44
        $region43: #{tpu_custom_call.1} parent=31 // pred_region
          %p333 = scmp.lt.s32.totalorder %s22, 1
          %s334 = scalar_select %p333, %s22, 1
          %s335 = smul.addr %s334, 8
          %s336 = scalar_lea.vmem %s4, %s335
        $region44: #{tpu_custom_call.1} parent=31 // pred_fallthru
          _
        // Predicated region
        $region45: #{tpu_custom_call.1} parent=31 // pred_check
          %p337 = pneg %p204
        $region46: #{tpu_custom_call.1} parent=31 // pred_check_branch
          %339 = sbr.rel (%p337) target = $region48
        $region47: #{tpu_custom_call.1} parent=31 // pred_region
          %p340 = scmp.lt.s32.totalorder %s22, 1
          %s341 = scalar_select %p340, %s22, 1
          %s342 = smul.addr %s341, 8
          %s343 = scalar_lea.vmem %s7, %s342
        $region48: #{tpu_custom_call.1} parent=31 // pred_fallthru
          _
        // Predicated region
        $region49: #{tpu_custom_call.1} parent=31 // pred_check
          %p344 = pneg %p230
        $region50: #{tpu_custom_call.1} parent=31 // pred_check_branch
          %346 = sbr.rel (%p344) target = $region52
        $region51: #{tpu_custom_call.1} parent=31 // pred_region
          %p347 = scmp.lt.s32.totalorder %s22, 1
          %s348 = scalar_select %p347, %s22, 1
          %s349 = smul.addr %s348, 8
          %s350 = scalar_lea.vmem %s8, %s349
        $region52: #{tpu_custom_call.1} parent=31 // pred_fallthru
          _
      $region32: #{tpu_custom_call.1} parent=5 // pred_fallthru
        _
      %p351 = scmp.le.s32.totalorder 1, %s22
      %p352 = scmp.lt.s32.totalorder %s22, 3
      %p353 = pnand %p351, %p352
      %p354 = pneg %p353
      // Predicated region
      $region53: #{tpu_custom_call.1} parent=5 // pred_check
        _
      $region54: #{tpu_custom_call.1} parent=5 // pred_check_branch
        %356 = sbr.rel (%p353) target = $region56
      $region55: #{tpu_custom_call.1} parent=5 // pred_region
        %s357 = ssub.s32 %s22, 1
        %s358 = sand.u32 %s35, 1
        %s359 = scalar_lea.sflag [#allocation3], %s358
        %s360 = sand.u32 %s35, 1
        %s361 = smul.addr %s360, 16
        %s362 = scalar_lea.vmem [#allocation2], %s361
        // Predicated region
        $region57: #{tpu_custom_call.1} parent=55 // pred_check
          %p363 = pneg %p48
        $region58: #{tpu_custom_call.1} parent=55 // pred_check_branch
          %365 = sbr.rel (%p363) target = $region60
        $region59: #{tpu_custom_call.1} parent=55 // pred_region
          %366 = dma.done %s359, 256
        $region60: #{tpu_custom_call.1} parent=55 // pred_fallthru
          _
        // Predicated region
        $region61: #{tpu_custom_call.1} parent=55 // pred_check
          %p367 = pneg %p69
        $region62: #{tpu_custom_call.1} parent=55 // pred_check_branch
          %369 = sbr.rel (%p367) target = $region64
        $region63: #{tpu_custom_call.1} parent=55 // pred_region
          %370 = dma.done [#allocation6], 2048
        $region64: #{tpu_custom_call.1} parent=55 // pred_fallthru
          _
        %s371 = sand.u32 %s35, 1
        %s372 = scalar_lea.sflag [#allocation3], %s371
        %s373 = sand.u32 %s35, 1
        %s374 = smul.addr %s373, 16
        %s375 = scalar_lea.vmem [#allocation2], %s374
        %p376 = pneg %p48
        %p377 = pneg %p45
        %p378 = pneg %p69
        %p379 = pneg %p66
        %p380 = pneg %p90
        %p381 = pneg %p87
        %p382 = scmp.lt.s32.totalorder %s27, 1
        %s383 = scalar_select %p382, %s27, 1
        %s384 = smul.addr %s383, 8
        %s385 = scalar_lea.vmem %s3, %s384
        %p386 = pneg %p116
        %p387 = pneg %p113
        %p388 = scmp.lt.s32.totalorder %s27, 1
        %s389 = scalar_select %p388, %s27, 1
        %s390 = smul.addr %s389, 8
        %s391 = scalar_lea.vmem %s4, %s390
        %p392 = pneg %p142
        %p393 = pneg %p139
        %p394 = pneg %p163
        %p395 = pneg %p160
        %p396 = pneg %p184
        %p397 = pneg %p181
        %p398 = scmp.lt.s32.totalorder %s27, 1
        %s399 = scalar_select %p398, %s27, 1
        %s400 = smul.addr %s399, 8
        %s401 = scalar_lea.vmem %s7, %s400
        %p402 = pneg %p210
        %p403 = pneg %p207
        %p404 = scmp.lt.s32.totalorder %s27, 1
        %s405 = scalar_select %p404, %s27, 1
        %s406 = smul.addr %s405, 8
        %s407 = scalar_lea.vmem %s8, %s406
        %p408 = pneg %p236
        %p409 = pneg %p233
        %p410 = pneg %p262
        %p411 = pneg %p259
        %s412 = sand.u32 %s249, 1
        %s413 = scalar_lea.sflag [#allocation4], %s412
        %s414 = sand.u32 %s249, 1
        %s415 = smul.addr %s414, 16
        %s416 = scalar_lea.vmem [#allocation7], %s415
        %p417 = scmp.lt.s32.totalorder %s27, 1
        %s418 = scalar_select %p417, %s27, 1
        %s419 = smul.addr %s418, 8
        %s420 = scalar_lea.vmem %s3, %s419
        %p421 = scmp.lt.s32.totalorder %s27, 1
        %s422 = scalar_select %p421, %s27, 1
        %s423 = smul.addr %s422, 8
        %s424 = scalar_lea.vmem %s4, %s423
        %p425 = scmp.lt.s32.totalorder %s27, 1
        %s426 = scalar_select %p425, %s27, 1
        %s427 = smul.addr %s426, 8
        %s428 = scalar_lea.vmem %s7, %s427
        %p429 = scmp.lt.s32.totalorder %s27, 1
        %s430 = scalar_select %p429, %s27, 1
        %s431 = smul.addr %s430, 8
        %s432 = scalar_lea.vmem %s8, %s431
        %v434 = vld [vmem:[%s362] sm:$0xff]
        %v435 = vld [vmem:[%s362 + $0x8] sm:$0xff]
        %v436 = vld [vmem:[#allocation5] sm:$0xff]
        %v437 = vld [vmem:[#allocation5 + $0x8] sm:$0xff]
        %v438 = vld [vmem:[#allocation5 + $0x10] sm:$0xff]
        %v439 = vld [vmem:[#allocation5 + $0x18] sm:$0xff]
        %v440 = vld [vmem:[#allocation5 + $0x20] sm:$0xff]
        %v441 = vld [vmem:[#allocation5 + $0x28] sm:$0xff]
        %v442 = vld [vmem:[#allocation5 + $0x30] sm:$0xff]
        %v443 = vld [vmem:[#allocation5 + $0x38] sm:$0xff]
        %v444 = vld [vmem:[#allocation5 + $0x40] sm:$0xff]
        %v445 = vld [vmem:[#allocation5 + $0x48] sm:$0xff]
        %v446 = vld [vmem:[#allocation5 + $0x50] sm:$0xff]
        %v447 = vld [vmem:[#allocation5 + $0x58] sm:$0xff]
        %v448 = vld [vmem:[#allocation5 + $0x60] sm:$0xff]
        %v449 = vld [vmem:[#allocation5 + $0x68] sm:$0xff]
        %v450 = vld [vmem:[#allocation5 + $0x70] sm:$0xff]
        %v451 = vld [vmem:[#allocation5 + $0x78] sm:$0xff]
        %v452 = vld [vmem:[%s2] sm:$0x1]
        %v454 = vlaneseq
        %v455 = vshrl.u32 %v454, 7
        %v456 = vsub.s32 0, %v455
        %v457 = vrot.slane %v452, %v456
        %459 = vmatprep.subr.mxu0 0.0
        %460 = vmatpush1.msra.mxu0 %v436
        %461 = vmatprep.subr.mxu0 0.0
        %462 = vmatpush1.msra.mxu0 %v437
        %463 = vmatprep.subr.mxu0 0.0
        %464 = vmatpush1.msra.mxu0 %v438
        %465 = vmatprep.subr.mxu0 0.0
        %466 = vmatpush1.msra.mxu0 %v439
        %467 = vmatprep.subr.mxu0 0.0
        %468 = vmatpush1.msra.mxu0 %v440
        %469 = vmatprep.subr.mxu0 0.0
        %470 = vmatpush1.msra.mxu0 %v441
        %471 = vmatprep.subr.mxu0 0.0
        %472 = vmatpush1.msra.mxu0 %v442
        %473 = vmatprep.subr.mxu0 0.0
        %474 = vmatpush1.msra.mxu0 %v443
        %475 = vmatprep.subr.mxu0 0.0
        %476 = vmatpush1.msra.mxu0 %v444
        %477 = vmatprep.subr.mxu0 0.0
        %478 = vmatpush1.msra.mxu0 %v445
        %479 = vmatprep.subr.mxu0 0.0
        %480 = vmatpush1.msra.mxu0 %v446
        %481 = vmatprep.subr.mxu0 0.0
        %482 = vmatpush1.msra.mxu0 %v447
        %483 = vmatprep.subr.mxu0 0.0
        %484 = vmatpush1.msra.mxu0 %v448
        %485 = vmatprep.subr.mxu0 0.0
        %486 = vmatpush1.msra.mxu0 %v449
        %487 = vmatprep.subr.mxu0 0.0
        %488 = vmatpush1.msra.mxu0 %v450
        %489 = vmatprep.subr.mxu0 0.0
        %490 = vmatpush1.msra.mxu0 %v451
        %491 = vmatprep.subr.mxu0 0.0
        %492 = vmatpush1.msra.mxu0 0.0
        %493 = vmatprep.subr.mxu0 0.0
        %494 = vmatpush1.msra.mxu0 0.0
        %495 = vmatprep.subr.mxu0 0.0
        %496 = vmatpush1.msra.mxu0 0.0
        %497 = vmatprep.subr.mxu0 0.0
        %498 = vmatpush1.msra.mxu0 0.0
        %499 = vmatprep.subr.mxu0 0.0
        %500 = vmatpush1.msra.mxu0 0.0
        %501 = vmatprep.subr.mxu0 0.0
        %502 = vmatpush1.msra.mxu0 0.0
        %503 = vmatprep.subr.mxu0 0.0
        %504 = vmatpush1.msra.mxu0 0.0
        %505 = vmatprep.subr.mxu0 0.0
        %506 = vmatpush1.msra.mxu0 0.0
        %507 = vmatprep.subr.mxu0 0.0
        %508 = vmatpush1.msra.mxu0 0.0
        %509 = vmatprep.subr.mxu0 0.0
        %510 = vmatpush1.msra.mxu0 0.0
        %511 = vmatprep.subr.mxu0 0.0
        %512 = vmatpush1.msra.mxu0 0.0
        %513 = vmatprep.subr.mxu0 0.0
        %514 = vmatpush1.msra.mxu0 0.0
        %515 = vmatprep.subr.mxu0 0.0
        %516 = vmatpush1.msra.mxu0 0.0
        %517 = vmatprep.subr.mxu0 0.0
        %518 = vmatpush1.msra.mxu0 0.0
        %519 = vmatprep.subr.mxu0 0.0
        %520 = vmatpush1.msra.mxu0 0.0
        %521 = vmatprep.subr.mxu0 0.0
        %522 = vmatpush1.msra.mxu0 0.0
        %523 = vmatprep.mubr.f32.mxu0 0.0
        %524 = vmatmul.mubr.f32.gmra.mrb[0].mxu0 %v434
        %v525 = vpop.f32.mrb[0].mxu0
        %v526 = vadd.f32 %v457, %v525
        %v527 = vpop.f32.mrb[0].mxu0
        %528 = vmatprep.mubr.f32.mxu0 0.0
        %529 = vmatmul.mubr.f32.gmra.mrb[0].mxu0 %v435
        %v530 = vpop.f32.mrb[0].mxu0
        %v531 = vadd.f32 %v457, %v530
        %v532 = vpop.f32.mrb[0].mxu0
        %533 = vdwg.mxu0
        %v534 = vadd.f32 %v526, %v531
        %535 = vadd.xlane.f32.xlu0 %v534
        %v536 = vpop.xlane.xlu0 %535
        %v537 = vmul.f32 %v536, 0.0078125
        %v538 = vmul.f32 %v526, %v526
        %v539 = vmul.f32 %v531, %v531
        %v540 = vadd.f32 %v538, %v539
        %541 = vadd.xlane.f32.xlu0 %v540
        %v542 = vpop.xlane.xlu0 %541
        %v543 = vmul.f32 %v542, 0.0078125
        %v544 = vmul.f32 %v537, %v537
        %v545 = vsub.f32 %v543, %v544
        %v546 = vld [vmem:[%s420] sm:$0xff]
        %v547 = vadd.f32 %v545, 1e-05
        %v548 = vrsqrt.pop %v547
        %v549 = vmul.f32 %v546, %v548
        %v550 = vld [vmem:[%s424] sm:$0xff]
        %v551 = vmul.f32 %v537, %v549
        %v552 = vsub.f32 %v550, %v551
        %554 = vset.pattern.permute.xlu0 0
        %555 = vperm.xlu0 %554, %v549
        %v556 = vpop.permute.xlu0 %555
        %v558 = vmul.f32 %v526, %v556
        %v559 = vmul.f32 %v531, %v556
        %561 = vset.pattern.permute.xlu0 0
        %562 = vperm.xlu0 %561, %v552
        %v563 = vpop.permute.xlu0 %562
        %v565 = vadd.f32 %v558, %v563
        %v566 = vadd.f32 %v559, %v563
        %vm567 = vcmp.ge.f32.partialorder %v565, 2.0
        %vm568 = vcmp.ge.f32.partialorder %v566, 2.0
        %v569 = vsel %vm567, 1, 0
        %v570 = vsel %vm568, 1, 0
        %v571 = vcvt.s32.f32 %v569
        %v572 = vcvt.s32.f32 %v570
        %v573 = vpack.c.bf16 %v571, %v571
        %v574 = vpack.c.bf16 %v572, %v572
        %v575 = vld [vmem:[%s5] sm:$0xf]
        %v576 = vld [vmem:[%s5 + $0x4] sm:$0xf]
        %v577 = vld [vmem:[%s5 + $0x8] sm:$0xf]
        %v578 = vld [vmem:[%s5 + $0xc] sm:$0xf]
        %v579 = vld [vmem:[%s5 + $0x10] sm:$0xf]
        %v580 = vld [vmem:[%s5 + $0x14] sm:$0xf]
        %v581 = vld [vmem:[%s5 + $0x18] sm:$0xf]
        %v582 = vld [vmem:[%s5 + $0x1c] sm:$0xf]
        %v583 = vld [vmem:[%s5 + $0x20] sm:$0xf]
        %v584 = vld [vmem:[%s5 + $0x24] sm:$0xf]
        %v585 = vld [vmem:[%s5 + $0x28] sm:$0xf]
        %v586 = vld [vmem:[%s5 + $0x2c] sm:$0xf]
        %v587 = vld [vmem:[%s5 + $0x30] sm:$0xf]
        %v588 = vld [vmem:[%s5 + $0x34] sm:$0xf]
        %v589 = vld [vmem:[%s5 + $0x38] sm:$0xf]
        %v590 = vld [vmem:[%s5 + $0x3c] sm:$0xf]
        %v591 = vld [vmem:[%s6] sm:$0x1]
        %v593 = vlaneseq
        %v594 = vshrl.u32 %v593, 7
        %v595 = vsub.s32 0, %v594
        %v596 = vrot.slane %v591, %v595
        %v600 = vunpack.c.l.b16 %v573
        %v601 = vunpack.c.l.b16 %v574
        %v602 = vpack.c.b16 %v601, %v600
        %v620 = vunpack.c.l.b16 %v575
        %v621 = vunpack.c.l.b16 %v576
        %v622 = vunpack.c.l.b16 %v577
        %v623 = vunpack.c.l.b16 %v578
        %v624 = vunpack.c.l.b16 %v579
        %v625 = vunpack.c.l.b16 %v580
        %v626 = vunpack.c.l.b16 %v581
        %v627 = vunpack.c.l.b16 %v582
        %v628 = vunpack.c.l.b16 %v583
        %v629 = vunpack.c.l.b16 %v584
        %v630 = vunpack.c.l.b16 %v585
        %v631 = vunpack.c.l.b16 %v586
        %v632 = vunpack.c.l.b16 %v587
        %v633 = vunpack.c.l.b16 %v588
        %v634 = vunpack.c.l.b16 %v589
        %v635 = vunpack.c.l.b16 %v590
        %v636 = vpack.c.b16 %v621, %v620
        %v637 = vpack.c.b16 %v623, %v622
        %v638 = vpack.c.b16 %v625, %v624
        %v639 = vpack.c.b16 %v627, %v626
        %v640 = vpack.c.b16 %v629, %v628
        %v641 = vpack.c.b16 %v631, %v630
        %v642 = vpack.c.b16 %v633, %v632
        %v643 = vpack.c.b16 %v635, %v634
        %652 = vmatprep.subr.bf16.mxu0 0
        %653 = vmatpush1.bf16.msra.mxu0 %v636
        %654 = vmatprep.subr.bf16.mxu0 0
        %655 = vmatpush1.bf16.msra.mxu0 %v637
        %656 = vmatprep.subr.bf16.mxu0 0
        %657 = vmatpush1.bf16.msra.mxu0 %v638
        %658 = vmatprep.subr.bf16.mxu0 0
        %659 = vmatpush1.bf16.msra.mxu0 %v639
        %660 = vmatprep.subr.bf16.mxu0 0
        %661 = vmatpush1.bf16.msra.mxu0 %v640
        %662 = vmatprep.subr.bf16.mxu0 0
        %663 = vmatpush1.bf16.msra.mxu0 %v641
        %664 = vmatprep.subr.bf16.mxu0 0
        %665 = vmatpush1.bf16.msra.mxu0 %v642
        %666 = vmatprep.subr.bf16.mxu0 0
        %667 = vmatpush1.bf16.msra.mxu0 %v643
        %668 = vmatprep.subr.bf16.mxu0 0
        %669 = vmatpush1.bf16.msra.mxu0 0
        %670 = vmatprep.subr.bf16.mxu0 0
        %671 = vmatpush1.bf16.msra.mxu0 0
        %672 = vmatprep.subr.bf16.mxu0 0
        %673 = vmatpush1.bf16.msra.mxu0 0
        %674 = vmatprep.subr.bf16.mxu0 0
        %675 = vmatpush1.bf16.msra.mxu0 0
        %676 = vmatprep.subr.bf16.mxu0 0
        %677 = vmatpush1.bf16.msra.mxu0 0
        %678 = vmatprep.subr.bf16.mxu0 0
        %679 = vmatpush1.bf16.msra.mxu0 0
        %680 = vmatprep.subr.bf16.mxu0 0
        %681 = vmatpush1.bf16.msra.mxu0 0
        %682 = vmatprep.subr.bf16.mxu0 0
        %683 = vmatpush1.bf16.msra.mxu0 0
        %684 = vmatprep.mubr.bf16.mxu0 0
        %685 = vmatmul.mubr.bf16.gmra.mrb[0].mxu0 %v602
        %v686 = vpop.f32.mrb[0].mxu0
        %v687 = vadd.f32 %v596, %v686
        %v688 = vpop.f32.mrb[0].mxu0
        %v689 = vpop.f32.mrb[0].mxu0
        %v690 = vadd.f32 %v596, %v689
        %v691 = vpop.f32.mrb[0].mxu0
        %692 = vdwg.mxu0
        %v693 = vadd.f32 %v687, %v690
        %694 = vadd.xlane.f32.xlu0 %v693
        %v695 = vpop.xlane.xlu0 %694
        %v696 = vmul.f32 %v695, 0.015625
        %v697 = vmul.f32 %v687, %v687
        %v698 = vmul.f32 %v690, %v690
        %v699 = vadd.f32 %v697, %v698
        %700 = vadd.xlane.f32.xlu0 %v699
        %v701 = vpop.xlane.xlu0 %700
        %v702 = vmul.f32 %v701, 0.015625
        %v703 = vmul.f32 %v696, %v696
        %v704 = vsub.f32 %v702, %v703
        %v705 = vld [vmem:[%s428] sm:$0xff]
        %v706 = vadd.f32 %v704, 1e-05
        %v707 = vrsqrt.pop %v706
        %v708 = vmul.f32 %v705, %v707
        %v709 = vld [vmem:[%s432] sm:$0xff]
        %v710 = vmul.f32 %v696, %v708
        %v711 = vsub.f32 %v709, %v710
        %713 = vset.pattern.permute.xlu0 0
        %714 = vperm.xlu0 %713, %v708
        %v715 = vpop.permute.xlu0 %714
        %v717 = vmul.f32 %v687, %v715
        %v718 = vmul.f32 %v690, %v715
        %720 = vset.pattern.permute.xlu0 0
        %721 = vperm.xlu0 %720, %v711
        %v722 = vpop.permute.xlu0 %721
        %v724 = vadd.f32 %v717, %v722
        %v725 = vadd.f32 %v718, %v722
        %726 = vst [vmem:[%s416] sm:$0xff] %v724
        %727 = vst [vmem:[%s416 + $0x8] sm:$0xff] %v725
        %s728 = sand.u32 %s249, 1
        %s729 = scalar_lea.sflag [#allocation4], %s728
        %s730 = sand.u32 %s249, 1
        %s731 = smul.addr %s730, 16
        %s732 = scalar_lea.vmem [#allocation7], %s731
        // Predicated region
        $region65: #{tpu_custom_call.1} parent=55 // pred_check
          %p733 = pneg %p259
        $region66: #{tpu_custom_call.1} parent=55 // pred_check_branch
          %735 = sbr.rel (%p733) target = $region68
        $region67: #{tpu_custom_call.1} parent=55 // pred_region
          %s737 = ssub.s32 256, 256
          %738 = vsyncadd %s729, %s737
          %s739 = smul.addr %s27, 128
          %s740 = scalar_lea.hbm %s9, %s739
          %s741 = sshll.u32 %s732, 4
          %s742 = int_to_ptr.vmem [resolvable:$true] %s741
          %747 = dma.vmem_to_hbm [thread:$0]  %s742, 256, %s740, %s729, 128, 256, 8
        $region68: #{tpu_custom_call.1} parent=55 // pred_fallthru
          _
      $region56: #{tpu_custom_call.1} parent=5 // pred_fallthru
        _
      %p748 = scmp.le.s32.totalorder 2, %s22
      // Predicated region
      $region69: #{tpu_custom_call.1} parent=5 // pred_check
        %p749 = pneg %p748
      $region70: #{tpu_custom_call.1} parent=5 // pred_check_branch
        %751 = sbr.rel (%p749) target = $region72
      $region71: #{tpu_custom_call.1} parent=5 // pred_region
        %s752 = ssub.s32 %s22, 2
        // Predicated region
        $region73: #{tpu_custom_call.1} parent=71 // pred_check
          %p753 = pneg %p265
        $region74: #{tpu_custom_call.1} parent=71 // pred_check_branch
          %755 = sbr.rel (%p753) target = $region76
        $region75: #{tpu_custom_call.1} parent=71 // pred_region
          %s756 = sand.u32 %s250, 1
          %s757 = scalar_lea.sflag [#allocation4], %s756
          %s758 = sand.u32 %s250, 1
          %s759 = smul.addr %s758, 16
          %s760 = scalar_lea.vmem [#allocation7], %s759
          %761 = dma.done %s757, 256
        $region76: #{tpu_custom_call.1} parent=71 // pred_fallthru
          _
      $region72: #{tpu_custom_call.1} parent=5 // pred_fallthru
        _
    $region6: #{tpu_custom_call.1} parent=1 // loop_footer
      %s26 = sadd.s32 1, %s22
    $region7: #{tpu_custom_call.1} parent=1 // loop_footer_branch
      %21 = sbr.rel target = $region3
    $region8: #{tpu_custom_call.1} parent=1 // loop_exit
      _
    %762 = vsyncpa [#allocation3], 1
    %s763 = scalar_lea.sflag [#allocation3], 1
    %764 = vsyncpa %s763, 1
    %765 = vsyncpa [#allocation6], 1
    %766 = vsyncpa [#allocation4], 1
    %s767 = scalar_lea.sflag [#allocation4], 1
    %768 = vsyncpa %s767, 1

</llo_original>
